<compile_context>
chip_gen: v7x
topology: tpu7x:2x2x1
jax: 0.10.0
libtpu: 0.0.40
codegen_flags: <defaults>
</compile_context>

<pallas_src>
import jax
import jax.numpy as jnp
from jax.experimental import pallas as pl
from jax.experimental.pallas import tpu as pltpu


def _mlp_kernel(x_ref, *refs):
    """Fused MLP forward in lane-dense [features, block_m] layout.

    refs = (w0, b0, w1, b1, ..., wL, bL, out_ref)
      x_ref : [in_size, block_m]
      w_i   : [fan_out, fan_in]   (PyTorch nn.Linear layout)
      b_i   : [fan_out, 1]
      out   : [out_size, block_m]
    """
    o_ref = refs[-1]
    params = refs[:-1]
    n_layers = len(params) // 2

    h = x_ref[...].astype(jnp.float32)                      # [fan_in, block_m]
    block_m = h.shape[1]
    for li in range(n_layers):
        w = params[2 * li][...].astype(jnp.float32)          # [fan_out, fan_in]
        b = params[2 * li + 1][...].astype(jnp.float32)      # [fan_out, 1]
        fan_out, fan_in = w.shape
        if fan_in <= 4:
            # Tiny contraction (e.g. the (x, t) input layer): two broadcast
            # multiply-adds on the VPU beat a 2/256-deep MXU pass.
            acc = jnp.broadcast_to(b, (fan_out, block_m))
            for f in range(fan_in):
                acc = acc + w[:, f:f + 1] * h[f:f + 1, :]
            h = acc
        else:
            h = jnp.dot(w, h, preferred_element_type=jnp.float32) + b
        if li < n_layers - 1:                                # no tanh on output layer
            h = jnp.tanh(h)
    o_ref[...] = h.astype(o_ref.dtype)                       # [out_size, block_m]


def _round_up(a, m):
    return (a + m - 1) // m * m


def mlp_forward(x, weights, biases, *, block_m=2048):
    """Run the fused MLP Pallas kernel.

    x:       [N, in_size]            float32
    weights: list of [fan_out, fan_in] float32   (PyTorch nn.Linear layout)
    biases:  list of [fan_out]         float32
    returns: [N, out_size]
    """
    n, in_size = x.shape
    out_size = weights[-1].shape[0]

    # Lane-dense block size: multiple of 128, and at least 2 grid steps when
    # the batch allows it (keeps both v7x TensorCores busy).
    block_m = max(128, min(block_m, _round_up(pl.cdiv(n, 2), 128)))
    n_pad = _round_up(n, block_m)
    grid = (n_pad // block_m,)

    # Transpose to [in_size, N] and zero-pad the (lane) batch axis.
    xt = jnp.zeros((in_size, n_pad), x.dtype).at[:, :n].set(x.T)

    # Weights/biases are small (~9 KiB total) -> keep them fully VMEM-resident.
    param_args, param_specs = [], []
    for w, b in zip(weights, biases):
        b2 = b.reshape(b.shape[0], 1)
        param_args += [w, b2]
        param_specs += [
            pl.BlockSpec(w.shape, lambda i: (0, 0)),
            pl.BlockSpec(b2.shape, lambda i: (0, 0)),
        ]

    # Advisory cost estimate for XLA's scheduler (kernel lives inside a PINN graph).
    sizes = [in_size] + [w.shape[0] for w in weights]
    flops = 2 * n_pad * sum(a * b for a, b in zip(sizes[:-1], sizes[1:]))
    transcendentals = n_pad * sum(sizes[1:-1])
    param_bytes = 4 * sum(w.size + b.size for w, b in zip(weights, biases))
    bytes_accessed = 4 * n_pad * (in_size + out_size) + param_bytes

    out_t = pl.pallas_call(
        _mlp_kernel,
        out_shape=jax.ShapeDtypeStruct((out_size, n_pad), x.dtype),
        grid_spec=pltpu.PrefetchScalarGridSpec(
            num_scalar_prefetch=0,
            grid=grid,
            in_specs=[pl.BlockSpec((in_size, block_m), lambda i: (0, i))] + param_specs,
            out_specs=pl.BlockSpec((out_size, block_m), lambda i: (0, i)),
        ),
        compiler_params=pltpu.CompilerParams(
            dimension_semantics=("parallel",),
        ),
        cost_estimate=pl.CostEstimate(
            flops=int(flops),
            transcendentals=int(transcendentals),
            bytes_accessed=int(bytes_accessed),
        ),
    )(xt, *param_args)

    # Back to [N, out_size], dropping padded rows.
    return out_t.T[:n]


def init_mlp_params(key, in_size, h_sizes, out_size):
    """Deterministic init mirroring nn.Linear's default U(-1/sqrt(fan_in), +1/sqrt(fan_in)).

    Weights are stored in PyTorch layout [fan_out, fan_in]; biases as [fan_out].
    """
    sizes = [in_size] + list(h_sizes) + [out_size]
    weights, biases = [], []
    for fan_in, fan_out in zip(sizes[:-1], sizes[1:]):
        key, kw, kb = jax.random.split(key, 3)
        bound = 1.0 / jnp.sqrt(float(fan_in))
        w = jax.random.uniform(kw, (fan_out, fan_in), jnp.float32, -bound, bound)
        b = jax.random.uniform(kb, (fan_out,), jnp.float32, -bound, bound)
        weights.append(w)
        biases.append(b)
    return weights, biases


def mlp_reference(x, weights, biases):
    """Pure-JAX reference of the PyTorch forward pass (tanh on all but last layer)."""
    h = x
    for li, (w, b) in enumerate(zip(weights, biases)):
        h = h @ w.T + b
        if li < len(weights) - 1:
            h = jnp.tanh(h)
    return h


if __name__ == "__main__":
    # Burgers PINN-style configuration: 2 inputs (x, t), a few hidden layers, 1 output (u).
    in_size = 2
    h_sizes = [32, 32, 32]
    out_size = 1
    batch = 256  # collocation points (grid = 2 blocks of 128 -> feeds both v7x cores)

    key = jax.random.PRNGKey(0)
    key, kx = jax.random.split(key)
    x = jax.random.normal(kx, (batch, in_size), jnp.float32)

    weights, biases = init_mlp_params(key, in_size, h_sizes, out_size)

    out = mlp_forward(x, weights, biases, block_m=128)
    out = jax.block_until_ready(out)

    ref = mlp_reference(x, weights, biases)
    assert out.shape == (batch, out_size)
    assert jnp.allclose(out, ref, atol=2e-5, rtol=2e-5), "Pallas MLP mismatch vs reference"

    print("KERNEL_OK")
</pallas_src>

<mosaic_0001>
module attributes {stable_mosaic.version = 11 : i64} {
  func.func @_mlp_kernel(%arg0: i32, %arg1: memref<2x128xf32, #tpu.memory_space<vmem>>, %arg2: memref<32x2xf32, #tpu.memory_space<vmem>>, %arg3: memref<32x1xf32, #tpu.memory_space<vmem>>, %arg4: memref<32x32xf32, #tpu.memory_space<vmem>>, %arg5: memref<32x1xf32, #tpu.memory_space<vmem>>, %arg6: memref<32x32xf32, #tpu.memory_space<vmem>>, %arg7: memref<32x1xf32, #tpu.memory_space<vmem>>, %arg8: memref<1x32xf32, #tpu.memory_space<vmem>>, %arg9: memref<1x1xf32, #tpu.memory_space<vmem>>, %arg10: memref<1x128xf32, #tpu.memory_space<vmem>>) attributes {dimension_semantics = [#tpu.dimension_semantics<parallel>], iteration_bounds = array<i64: 2>, scalar_prefetch = 0 : i64, scratch_operands = 0 : i64, tpu.core_type = #tpu.core_type<tc>, window_params = [{transform_indices = @transform_0, window_bounds = array<i64: 2, 128>}, {pipeline_mode = #tpu.pipeline_mode<synchronous>, transform_indices = @transform_1, window_bounds = array<i64: 32, 2>}, {pipeline_mode = #tpu.pipeline_mode<synchronous>, transform_indices = @transform_2, window_bounds = array<i64: 32, 1>}, {pipeline_mode = #tpu.pipeline_mode<synchronous>, transform_indices = @transform_3, window_bounds = array<i64: 32, 32>}, {pipeline_mode = #tpu.pipeline_mode<synchronous>, transform_indices = @transform_4, window_bounds = array<i64: 32, 1>}, {pipeline_mode = #tpu.pipeline_mode<synchronous>, transform_indices = @transform_5, window_bounds = array<i64: 32, 32>}, {pipeline_mode = #tpu.pipeline_mode<synchronous>, transform_indices = @transform_6, window_bounds = array<i64: 32, 1>}, {pipeline_mode = #tpu.pipeline_mode<synchronous>, transform_indices = @transform_7, window_bounds = array<i64: 1, 32>}, {pipeline_mode = #tpu.pipeline_mode<synchronous>, transform_indices = @transform_8, window_bounds = array<i64: 1, 1>}, {transform_indices = @transform_9, window_bounds = array<i64: 1, 128>}]} {
    %c0 = arith.constant 0 : index
    %c0_0 = arith.constant 0 : index
    %0 = vector.load %arg1[%c0, %c0_0] : memref<2x128xf32, #tpu.memory_space<vmem>>, vector<2x128xf32>
    %c0_1 = arith.constant 0 : index
    %c0_2 = arith.constant 0 : index
    %1 = vector.load %arg2[%c0_1, %c0_2] : memref<32x2xf32, #tpu.memory_space<vmem>>, vector<32x2xf32>
    %c0_3 = arith.constant 0 : index
    %c0_4 = arith.constant 0 : index
    %2 = vector.load %arg3[%c0_3, %c0_4] : memref<32x1xf32, #tpu.memory_space<vmem>>, vector<32x1xf32>
    %3 = vector.shape_cast %2 : vector<32x1xf32> to vector<32x1xf32>
    %4 = vector.broadcast %3 : vector<32x1xf32> to vector<32x128xf32>
    %5 = vector.extract_strided_slice %1 {offsets = [0, 0], sizes = [32, 1], strides = [1, 1]} : vector<32x2xf32> to vector<32x1xf32>
    %6 = vector.extract_strided_slice %0 {offsets = [0, 0], sizes = [1, 128], strides = [1, 1]} : vector<2x128xf32> to vector<1x128xf32>
    %7 = vector.broadcast %5 : vector<32x1xf32> to vector<32x128xf32>
    %8 = vector.broadcast %6 : vector<1x128xf32> to vector<32x128xf32>
    %9 = arith.mulf %7, %8 : vector<32x128xf32>
    %10 = arith.addf %4, %9 : vector<32x128xf32>
    %11 = vector.extract_strided_slice %1 {offsets = [0, 1], sizes = [32, 1], strides = [1, 1]} : vector<32x2xf32> to vector<32x1xf32>
    %12 = vector.extract_strided_slice %0 {offsets = [1, 0], sizes = [1, 128], strides = [1, 1]} : vector<2x128xf32> to vector<1x128xf32>
    %13 = vector.broadcast %11 : vector<32x1xf32> to vector<32x128xf32>
    %14 = vector.broadcast %12 : vector<1x128xf32> to vector<32x128xf32>
    %15 = arith.mulf %13, %14 : vector<32x128xf32>
    %16 = arith.addf %10, %15 : vector<32x128xf32>
    %17 = math.tanh %16 : vector<32x128xf32>
    %c0_5 = arith.constant 0 : index
    %c0_6 = arith.constant 0 : index
    %18 = vector.load %arg4[%c0_5, %c0_6] : memref<32x32xf32, #tpu.memory_space<vmem>>, vector<32x32xf32>
    %c0_7 = arith.constant 0 : index
    %c0_8 = arith.constant 0 : index
    %19 = vector.load %arg5[%c0_7, %c0_8] : memref<32x1xf32, #tpu.memory_space<vmem>>, vector<32x1xf32>
    %cst = arith.constant dense<0.000000e+00> : vector<32x128xf32>
    %20 = tpu.matmul %18, %17, %cst {dimension_numbers = #tpu.dot_dimension_numbers<[1], [0], [0], [1], [0, 0, 1, 1], [], []>} : vector<32x32xf32>, vector<32x128xf32>, vector<32x128xf32> -> vector<32x128xf32>
    %21 = vector.broadcast %19 : vector<32x1xf32> to vector<32x128xf32>
    %22 = arith.addf %20, %21 : vector<32x128xf32>
    %23 = math.tanh %22 : vector<32x128xf32>
    %c0_9 = arith.constant 0 : index
    %c0_10 = arith.constant 0 : index
    %24 = vector.load %arg6[%c0_9, %c0_10] : memref<32x32xf32, #tpu.memory_space<vmem>>, vector<32x32xf32>
    %c0_11 = arith.constant 0 : index
    %c0_12 = arith.constant 0 : index
    %25 = vector.load %arg7[%c0_11, %c0_12] : memref<32x1xf32, #tpu.memory_space<vmem>>, vector<32x1xf32>
    %cst_13 = arith.constant dense<0.000000e+00> : vector<32x128xf32>
    %26 = tpu.matmul %24, %23, %cst_13 {dimension_numbers = #tpu.dot_dimension_numbers<[1], [0], [0], [1], [0, 0, 1, 1], [], []>} : vector<32x32xf32>, vector<32x128xf32>, vector<32x128xf32> -> vector<32x128xf32>
    %27 = vector.broadcast %25 : vector<32x1xf32> to vector<32x128xf32>
    %28 = arith.addf %26, %27 : vector<32x128xf32>
    %29 = math.tanh %28 : vector<32x128xf32>
    %c0_14 = arith.constant 0 : index
    %c0_15 = arith.constant 0 : index
    %30 = vector.load %arg8[%c0_14, %c0_15] : memref<1x32xf32, #tpu.memory_space<vmem>>, vector<1x32xf32>
    %c0_16 = arith.constant 0 : index
    %c0_17 = arith.constant 0 : index
    %31 = vector.load %arg9[%c0_16, %c0_17] : memref<1x1xf32, #tpu.memory_space<vmem>>, vector<1x1xf32>
    %cst_18 = arith.constant dense<0.000000e+00> : vector<1x128xf32>
    %32 = tpu.matmul %30, %29, %cst_18 {dimension_numbers = #tpu.dot_dimension_numbers<[1], [0], [0], [1], [0, 0, 1, 1], [], []>} : vector<1x32xf32>, vector<32x128xf32>, vector<1x128xf32> -> vector<1x128xf32>
    %33 = vector.broadcast %31 : vector<1x1xf32> to vector<1x128xf32>
    %34 = arith.addf %32, %33 : vector<1x128xf32>
    %c0_19 = arith.constant 0 : index
    %c0_20 = arith.constant 0 : index
    %35 = vector.load %arg10[%c0_19, %c0_20] : memref<1x128xf32, #tpu.memory_space<vmem>>, vector<1x128xf32>
    tpu.vector_store %arg10[%c0_19, %c0_20], %34 {strides = array<i32>} : memref<1x128xf32, #tpu.memory_space<vmem>>, vector<1x128xf32>,
    return
  }
  func.func @transform_0(%arg0: i32) -> (i32, i32) {
    %c0_i32 = arith.constant 0 : i32
    %c0_i32_0 = arith.constant 0 : i32
    return %c0_i32, %arg0 : i32, i32
  }
  func.func @transform_1(%arg0: i32) -> (i32, i32) {
    %c0_i32 = arith.constant 0 : i32
    %c0_i32_0 = arith.constant 0 : i32
    %c0_i32_1 = arith.constant 0 : i32
    return %c0_i32, %c0_i32_0 : i32, i32
  }
  func.func @transform_2(%arg0: i32) -> (i32, i32) {
    %c0_i32 = arith.constant 0 : i32
    %c0_i32_0 = arith.constant 0 : i32
    %c0_i32_1 = arith.constant 0 : i32
    return %c0_i32, %c0_i32_0 : i32, i32
  }
  func.func @transform_3(%arg0: i32) -> (i32, i32) {
    %c0_i32 = arith.constant 0 : i32
    %c0_i32_0 = arith.constant 0 : i32
    %c0_i32_1 = arith.constant 0 : i32
    return %c0_i32, %c0_i32_0 : i32, i32
  }
  func.func @transform_4(%arg0: i32) -> (i32, i32) {
    %c0_i32 = arith.constant 0 : i32
    %c0_i32_0 = arith.constant 0 : i32
    %c0_i32_1 = arith.constant 0 : i32
    return %c0_i32, %c0_i32_0 : i32, i32
  }
  func.func @transform_5(%arg0: i32) -> (i32, i32) {
    %c0_i32 = arith.constant 0 : i32
    %c0_i32_0 = arith.constant 0 : i32
    %c0_i32_1 = arith.constant 0 : i32
    return %c0_i32, %c0_i32_0 : i32, i32
  }
  func.func @transform_6(%arg0: i32) -> (i32, i32) {
    %c0_i32 = arith.constant 0 : i32
    %c0_i32_0 = arith.constant 0 : i32
    %c0_i32_1 = arith.constant 0 : i32
    return %c0_i32, %c0_i32_0 : i32, i32
  }
  func.func @transform_7(%arg0: i32) -> (i32, i32) {
    %c0_i32 = arith.constant 0 : i32
    %c0_i32_0 = arith.constant 0 : i32
    %c0_i32_1 = arith.constant 0 : i32
    return %c0_i32, %c0_i32_0 : i32, i32
  }
  func.func @transform_8(%arg0: i32) -> (i32, i32) {
    %c0_i32 = arith.constant 0 : i32
    %c0_i32_0 = arith.constant 0 : i32
    %c0_i32_1 = arith.constant 0 : i32
    return %c0_i32, %c0_i32_0 : i32, i32
  }
  func.func @transform_9(%arg0: i32) -> (i32, i32) {
    %c0_i32 = arith.constant 0 : i32
    %c0_i32_0 = arith.constant 0 : i32
    return %c0_i32, %arg0 : i32, i32
  }
}

</mosaic_0001>

<llo_original>
// kernel: tpu_custom_call.1
$region0: #{tpu_custom_call.1}
  #allocation0 [shape = 'u32[]', space=smem, size = 0x4, offset = 0x4, fixed_abs, tag = 'smem constant byte address 0x4 - core index']
  #allocation1 [shape = 'u32[144,128]{1,0:T(1,128)}', space=vmem, size = 0x12000, scoped, tag = 'internal scratch']
  #allocation2 [shape = 'f32[1,1]{1,0:T(1,128)S(1)}', space=vmem, size = 0x200, scoped, tag = 'scoped memory for tpu_custom_call.1']
  %s0 = inlined_call_operand.vmem [shape: f32[2,256], index: 0, kind: input, shape index: {}]
  %s1 = inlined_call_operand.vmem [shape: f32[32,2], index: 1, kind: input, shape index: {}]
  %s2 = inlined_call_operand.vmem [shape: f32[32,1], index: 2, kind: input, shape index: {}]
  %s3 = inlined_call_operand.vmem [shape: f32[32,32], index: 3, kind: input, shape index: {}]
  %s4 = inlined_call_operand.vmem [shape: f32[32,1], index: 4, kind: input, shape index: {}]
  %s5 = inlined_call_operand.vmem [shape: f32[32,32], index: 5, kind: input, shape index: {}]
  %s6 = inlined_call_operand.vmem [shape: f32[32,1], index: 6, kind: input, shape index: {}]
  %s7 = inlined_call_operand.vmem [shape: f32[1,32], index: 7, kind: input, shape index: {}]
  %s8 = inlined_call_operand.<no memory space> [shape: f32[1,1], index: 8, kind: input, shape index: {}]
  %s9 = inlined_call_operand.hbm [shape: f32[1,256], index: 9, kind: output, shape index: {}]
  %s10 = sld [smem:[#allocation0]]
  $region69: #{tpu_custom_call.1} parent=0
    _
  %s12 = ssub.s32 1, %s10
  %s13 = scalar_select 0, %s12, %s10
  %v14 = vstv %s8
  %15 = vst [vmem:[#allocation2] sm:$0x1] %v14
  $region1: #{tpu_custom_call.1} parent=0
    #allocation3 [shape = 'u8[1024]{0}', space=vmem, size = 0x400, scoped, tag = 'output window, operand 0']
    #allocation4 [shape = 's32[2]{0}', space=sflag, size = 0x8, scoped, tag = 'scoped memory for tpu_custom_call.1']
    %16 = vsyncpa [#allocation4], 0
    %s17 = scalar_lea.sflag [#allocation4], 1
    %18 = vsyncpa %s17, 0
    loop: start=0, step=1, limit=4
    $region2: #{tpu_custom_call.1} parent=1 // loop_pre_header
      _
    $region3: #{tpu_custom_call.1} parent=1 // loop_header
      %s20 = sphi 0, %s24
      %p21 = scmp.ge.s32.totalorder %s20, 4
      %s30 = sphi 0, %s32
      %s33 = sphi 0, %s30
      %s34 = sphi 0, %s33
      %s50 = sphi 0, %s34
      %s54 = sphi 0, %s54
      %s56 = sphi 0, %s54
      %s57 = sphi 0, %s56
      %s71 = sphi 0, %s57
      %s75 = sphi 0, %s75
      %s77 = sphi 0, %s75
      %s78 = sphi 0, %s77
      %s92 = sphi 0, %s78
      %s96 = sphi 0, %s96
      %s98 = sphi 0, %s96
      %s99 = sphi 0, %s98
      %s113 = sphi 0, %s99
      %s117 = sphi 0, %s117
      %s119 = sphi 0, %s117
      %s120 = sphi 0, %s119
      %s134 = sphi 0, %s120
      %s138 = sphi 0, %s138
      %s140 = sphi 0, %s138
      %s141 = sphi 0, %s140
      %s155 = sphi 0, %s141
      %s159 = sphi 0, %s159
      %s161 = sphi 0, %s159
      %s162 = sphi 0, %s161
      %s176 = sphi 0, %s162
      %s180 = sphi 0, %s180
      %s182 = sphi 0, %s180
      %s183 = sphi 0, %s182
      %s197 = sphi 0, %s183
      %s201 = sphi 0, %s201
      %s203 = sphi 0, %s201
      %s204 = sphi 0, %s203
      %s218 = sphi 0, %s204
      %s224 = sphi 0, %s226
      %s227 = sphi 0, %s224
      %s228 = sphi 0, %s227
      %s244 = sphi 0, %s228
    $region4: #{tpu_custom_call.1} parent=1 // loop_header_branch
      %23 = sbr.rel (%p21) target = $region8
    $region5: #{tpu_custom_call.1} parent=1 // loop_body
      %s25 = ssub.s32 %s20, 1
      %s26 = ssub.s32 %s20, 2
      %s27 = sadd.s32 %s20, 1
      %s28 = ssub.s32 %s20, %s27
      %p29 = scmp.eq.s32.totalorder %s28, 0
      %s31 = sadd.s32 %s30, 1
      %s32 = scalar_select %p29, %s30, %s31
      %p35 = pneg %p29
      %p36 = scmp.eq.s32.totalorder %s20, 1
      %p37 = por %p35, %p36
      %p38 = scmp.ne.s32.totalorder %s30, %s33
      %p39 = scmp.eq.s32.totalorder %s20, 0
      %p40 = por %p38, %p39
      %p41 = scmp.ne.s32.totalorder %s30, %s33
      %p42 = scmp.eq.s32.totalorder %s25, 1
      %p43 = por %p41, %p42
      %p44 = scmp.ne.s32.totalorder %s33, %s34
      %p45 = scmp.eq.s32.totalorder %s25, 0
      %p46 = por %p44, %p45
      %p47 = scmp.ne.s32.totalorder %s33, %s34
      %p48 = scmp.eq.s32.totalorder %s26, 1
      %p49 = por %p47, %p48
      %p51 = scmp.ne.s32.totalorder %s34, %s50
      %p52 = scmp.eq.s32.totalorder %s26, 0
      %p53 = por %p51, %p52
      %s55 = sadd.s32 %s54, 1
      %p58 = scmp.eq.s32.totalorder %s20, 1
      %p59 = scmp.ne.s32.totalorder %s54, %s56
      %p60 = scmp.eq.s32.totalorder %s20, 0
      %p61 = por %p59, %p60
      %p62 = scmp.ne.s32.totalorder %s54, %s56
      %p63 = scmp.eq.s32.totalorder %s25, 1
      %p64 = por %p62, %p63
      %p65 = scmp.ne.s32.totalorder %s56, %s57
      %p66 = scmp.eq.s32.totalorder %s25, 0
      %p67 = por %p65, %p66
      %p68 = scmp.ne.s32.totalorder %s56, %s57
      %p69 = scmp.eq.s32.totalorder %s26, 1
      %p70 = por %p68, %p69
      %p72 = scmp.ne.s32.totalorder %s57, %s71
      %p73 = scmp.eq.s32.totalorder %s26, 0
      %p74 = por %p72, %p73
      %s76 = sadd.s32 %s75, 1
      %p79 = scmp.eq.s32.totalorder %s20, 1
      %p80 = scmp.ne.s32.totalorder %s75, %s77
      %p81 = scmp.eq.s32.totalorder %s20, 0
      %p82 = por %p80, %p81
      %p83 = scmp.ne.s32.totalorder %s75, %s77
      %p84 = scmp.eq.s32.totalorder %s25, 1
      %p85 = por %p83, %p84
      %p86 = scmp.ne.s32.totalorder %s77, %s78
      %p87 = scmp.eq.s32.totalorder %s25, 0
      %p88 = por %p86, %p87
      %p89 = scmp.ne.s32.totalorder %s77, %s78
      %p90 = scmp.eq.s32.totalorder %s26, 1
      %p91 = por %p89, %p90
      %p93 = scmp.ne.s32.totalorder %s78, %s92
      %p94 = scmp.eq.s32.totalorder %s26, 0
      %p95 = por %p93, %p94
      %s97 = sadd.s32 %s96, 1
      %p100 = scmp.eq.s32.totalorder %s20, 1
      %p101 = scmp.ne.s32.totalorder %s96, %s98
      %p102 = scmp.eq.s32.totalorder %s20, 0
      %p103 = por %p101, %p102
      %p104 = scmp.ne.s32.totalorder %s96, %s98
      %p105 = scmp.eq.s32.totalorder %s25, 1
      %p106 = por %p104, %p105
      %p107 = scmp.ne.s32.totalorder %s98, %s99
      %p108 = scmp.eq.s32.totalorder %s25, 0
      %p109 = por %p107, %p108
      %p110 = scmp.ne.s32.totalorder %s98, %s99
      %p111 = scmp.eq.s32.totalorder %s26, 1
      %p112 = por %p110, %p111
      %p114 = scmp.ne.s32.totalorder %s99, %s113
      %p115 = scmp.eq.s32.totalorder %s26, 0
      %p116 = por %p114, %p115
      %s118 = sadd.s32 %s117, 1
      %p121 = scmp.eq.s32.totalorder %s20, 1
      %p122 = scmp.ne.s32.totalorder %s117, %s119
      %p123 = scmp.eq.s32.totalorder %s20, 0
      %p124 = por %p122, %p123
      %p125 = scmp.ne.s32.totalorder %s117, %s119
      %p126 = scmp.eq.s32.totalorder %s25, 1
      %p127 = por %p125, %p126
      %p128 = scmp.ne.s32.totalorder %s119, %s120
      %p129 = scmp.eq.s32.totalorder %s25, 0
      %p130 = por %p128, %p129
      %p131 = scmp.ne.s32.totalorder %s119, %s120
      %p132 = scmp.eq.s32.totalorder %s26, 1
      %p133 = por %p131, %p132
      %p135 = scmp.ne.s32.totalorder %s120, %s134
      %p136 = scmp.eq.s32.totalorder %s26, 0
      %p137 = por %p135, %p136
      %s139 = sadd.s32 %s138, 1
      %p142 = scmp.eq.s32.totalorder %s20, 1
      %p143 = scmp.ne.s32.totalorder %s138, %s140
      %p144 = scmp.eq.s32.totalorder %s20, 0
      %p145 = por %p143, %p144
      %p146 = scmp.ne.s32.totalorder %s138, %s140
      %p147 = scmp.eq.s32.totalorder %s25, 1
      %p148 = por %p146, %p147
      %p149 = scmp.ne.s32.totalorder %s140, %s141
      %p150 = scmp.eq.s32.totalorder %s25, 0
      %p151 = por %p149, %p150
      %p152 = scmp.ne.s32.totalorder %s140, %s141
      %p153 = scmp.eq.s32.totalorder %s26, 1
      %p154 = por %p152, %p153
      %p156 = scmp.ne.s32.totalorder %s141, %s155
      %p157 = scmp.eq.s32.totalorder %s26, 0
      %p158 = por %p156, %p157
      %s160 = sadd.s32 %s159, 1
      %p163 = scmp.eq.s32.totalorder %s20, 1
      %p164 = scmp.ne.s32.totalorder %s159, %s161
      %p165 = scmp.eq.s32.totalorder %s20, 0
      %p166 = por %p164, %p165
      %p167 = scmp.ne.s32.totalorder %s159, %s161
      %p168 = scmp.eq.s32.totalorder %s25, 1
      %p169 = por %p167, %p168
      %p170 = scmp.ne.s32.totalorder %s161, %s162
      %p171 = scmp.eq.s32.totalorder %s25, 0
      %p172 = por %p170, %p171
      %p173 = scmp.ne.s32.totalorder %s161, %s162
      %p174 = scmp.eq.s32.totalorder %s26, 1
      %p175 = por %p173, %p174
      %p177 = scmp.ne.s32.totalorder %s162, %s176
      %p178 = scmp.eq.s32.totalorder %s26, 0
      %p179 = por %p177, %p178
      %s181 = sadd.s32 %s180, 1
      %p184 = scmp.eq.s32.totalorder %s20, 1
      %p185 = scmp.ne.s32.totalorder %s180, %s182
      %p186 = scmp.eq.s32.totalorder %s20, 0
      %p187 = por %p185, %p186
      %p188 = scmp.ne.s32.totalorder %s180, %s182
      %p189 = scmp.eq.s32.totalorder %s25, 1
      %p190 = por %p188, %p189
      %p191 = scmp.ne.s32.totalorder %s182, %s183
      %p192 = scmp.eq.s32.totalorder %s25, 0
      %p193 = por %p191, %p192
      %p194 = scmp.ne.s32.totalorder %s182, %s183
      %p195 = scmp.eq.s32.totalorder %s26, 1
      %p196 = por %p194, %p195
      %p198 = scmp.ne.s32.totalorder %s183, %s197
      %p199 = scmp.eq.s32.totalorder %s26, 0
      %p200 = por %p198, %p199
      %s202 = sadd.s32 %s201, 1
      %p205 = scmp.eq.s32.totalorder %s20, 1
      %p206 = scmp.ne.s32.totalorder %s201, %s203
      %p207 = scmp.eq.s32.totalorder %s20, 0
      %p208 = por %p206, %p207
      %p209 = scmp.ne.s32.totalorder %s201, %s203
      %p210 = scmp.eq.s32.totalorder %s25, 1
      %p211 = por %p209, %p210
      %p212 = scmp.ne.s32.totalorder %s203, %s204
      %p213 = scmp.eq.s32.totalorder %s25, 0
      %p214 = por %p212, %p213
      %p215 = scmp.ne.s32.totalorder %s203, %s204
      %p216 = scmp.eq.s32.totalorder %s26, 1
      %p217 = por %p215, %p216
      %p219 = scmp.ne.s32.totalorder %s204, %s218
      %p220 = scmp.eq.s32.totalorder %s26, 0
      %p221 = por %p219, %p220
      %s222 = ssub.s32 %s20, %s27
      %p223 = scmp.eq.s32.totalorder %s222, 0
      %s225 = sadd.s32 %s224, 1
      %s226 = scalar_select %p223, %s224, %s225
      %p229 = pneg %p223
      %p230 = scmp.eq.s32.totalorder %s20, 1
      %p231 = por %p229, %p230
      %p232 = scmp.ne.s32.totalorder %s224, %s227
      %p233 = scmp.eq.s32.totalorder %s20, 0
      %p234 = por %p232, %p233
      %p235 = scmp.ne.s32.totalorder %s224, %s227
      %p236 = scmp.eq.s32.totalorder %s25, 1
      %p237 = por %p235, %p236
      %p238 = scmp.ne.s32.totalorder %s227, %s228
      %p239 = scmp.eq.s32.totalorder %s25, 0
      %p240 = por %p238, %p239
      %p241 = scmp.ne.s32.totalorder %s227, %s228
      %p242 = scmp.eq.s32.totalorder %s26, 1
      %p243 = por %p241, %p242
      %p245 = scmp.ne.s32.totalorder %s228, %s244
      %p246 = scmp.eq.s32.totalorder %s26, 0
      %p247 = por %p245, %p246
      %p248 = scmp.le.s32.totalorder 1, %s20
      %p249 = scmp.lt.s32.totalorder %s20, 3
      %p250 = pnand %p248, %p249
      %p251 = pneg %p250
      // Predicated region
      $region9: #{tpu_custom_call.1} parent=5 // pred_check
        _
      $region10: #{tpu_custom_call.1} parent=5 // pred_check_branch
        %253 = sbr.rel (%p250) target = $region12
      $region11: #{tpu_custom_call.1} parent=5 // pred_region
        %s254 = ssub.s32 %s20, 1
        // Predicated region
        $region13: #{tpu_custom_call.1} parent=11 // pred_check
          %p255 = pneg %p67
        $region14: #{tpu_custom_call.1} parent=11 // pred_check_branch
          %257 = sbr.rel (%p255) target = $region16
        $region15: #{tpu_custom_call.1} parent=11 // pred_region
          _
        $region16: #{tpu_custom_call.1} parent=11 // pred_fallthru
          _
        // Predicated region
        $region17: #{tpu_custom_call.1} parent=11 // pred_check
          %p258 = pneg %p88
        $region18: #{tpu_custom_call.1} parent=11 // pred_check_branch
          %260 = sbr.rel (%p258) target = $region20
        $region19: #{tpu_custom_call.1} parent=11 // pred_region
          _
        $region20: #{tpu_custom_call.1} parent=11 // pred_fallthru
          _
        // Predicated region
        $region21: #{tpu_custom_call.1} parent=11 // pred_check
          %p261 = pneg %p109
        $region22: #{tpu_custom_call.1} parent=11 // pred_check_branch
          %263 = sbr.rel (%p261) target = $region24
        $region23: #{tpu_custom_call.1} parent=11 // pred_region
          _
        $region24: #{tpu_custom_call.1} parent=11 // pred_fallthru
          _
        // Predicated region
        $region25: #{tpu_custom_call.1} parent=11 // pred_check
          %p264 = pneg %p130
        $region26: #{tpu_custom_call.1} parent=11 // pred_check_branch
          %266 = sbr.rel (%p264) target = $region28
        $region27: #{tpu_custom_call.1} parent=11 // pred_region
          _
        $region28: #{tpu_custom_call.1} parent=11 // pred_fallthru
          _
        // Predicated region
        $region29: #{tpu_custom_call.1} parent=11 // pred_check
          %p267 = pneg %p151
        $region30: #{tpu_custom_call.1} parent=11 // pred_check_branch
          %269 = sbr.rel (%p267) target = $region32
        $region31: #{tpu_custom_call.1} parent=11 // pred_region
          _
        $region32: #{tpu_custom_call.1} parent=11 // pred_fallthru
          _
        // Predicated region
        $region33: #{tpu_custom_call.1} parent=11 // pred_check
          %p270 = pneg %p172
        $region34: #{tpu_custom_call.1} parent=11 // pred_check_branch
          %272 = sbr.rel (%p270) target = $region36
        $region35: #{tpu_custom_call.1} parent=11 // pred_region
          _
        $region36: #{tpu_custom_call.1} parent=11 // pred_fallthru
          _
        // Predicated region
        $region37: #{tpu_custom_call.1} parent=11 // pred_check
          %p273 = pneg %p193
        $region38: #{tpu_custom_call.1} parent=11 // pred_check_branch
          %275 = sbr.rel (%p273) target = $region40
        $region39: #{tpu_custom_call.1} parent=11 // pred_region
          _
        $region40: #{tpu_custom_call.1} parent=11 // pred_fallthru
          _
        // Predicated region
        $region41: #{tpu_custom_call.1} parent=11 // pred_check
          %p276 = pneg %p214
        $region42: #{tpu_custom_call.1} parent=11 // pred_check_branch
          %278 = sbr.rel (%p276) target = $region44
        $region43: #{tpu_custom_call.1} parent=11 // pred_region
          _
        $region44: #{tpu_custom_call.1} parent=11 // pred_fallthru
          _
      $region12: #{tpu_custom_call.1} parent=5 // pred_fallthru
        _
      %p279 = scmp.lt.s32.totalorder %s20, 2
      // Predicated region
      $region45: #{tpu_custom_call.1} parent=5 // pred_check
        %p280 = pneg %p279
      $region46: #{tpu_custom_call.1} parent=5 // pred_check_branch
        %282 = sbr.rel (%p280) target = $region48
      $region47: #{tpu_custom_call.1} parent=5 // pred_region
        // Predicated region
        $region49: #{tpu_custom_call.1} parent=47 // pred_check
          %p283 = pneg %p40
        $region50: #{tpu_custom_call.1} parent=47 // pred_check_branch
          %285 = sbr.rel (%p283) target = $region52
        $region51: #{tpu_custom_call.1} parent=47 // pred_region
          %p286 = scmp.lt.s32.totalorder %s20, 1
          %s287 = scalar_select %p286, %s20, 1
          %s288 = smul.addr %s287, 2
          %s289 = scalar_lea.vmem %s0, %s288
        $region52: #{tpu_custom_call.1} parent=47 // pred_fallthru
          _
      $region48: #{tpu_custom_call.1} parent=5 // pred_fallthru
        _
      %p290 = scmp.le.s32.totalorder 1, %s20
      %p291 = scmp.lt.s32.totalorder %s20, 3
      %p292 = pnand %p290, %p291
      %p293 = pneg %p292
      // Predicated region
      $region53: #{tpu_custom_call.1} parent=5 // pred_check
        _
      $region54: #{tpu_custom_call.1} parent=5 // pred_check_branch
        %295 = sbr.rel (%p292) target = $region56
      $region55: #{tpu_custom_call.1} parent=5 // pred_region
        %s296 = ssub.s32 %s20, 1
        %p297 = scmp.lt.s32.totalorder %s25, 1
        %s298 = scalar_select %p297, %s25, 1
        %s299 = smul.addr %s298, 2
        %s300 = scalar_lea.vmem %s0, %s299
        %p301 = pneg %p46
        %p302 = pneg %p43
        %p303 = pneg %p67
        %p304 = pneg %p64
        %p305 = pneg %p88
        %p306 = pneg %p85
        %p307 = pneg %p109
        %p308 = pneg %p106
        %p309 = pneg %p130
        %p310 = pneg %p127
        %p311 = pneg %p151
        %p312 = pneg %p148
        %p313 = pneg %p172
        %p314 = pneg %p169
        %p315 = pneg %p193
        %p316 = pneg %p190
        %p317 = pneg %p214
        %p318 = pneg %p211
        %p319 = pneg %p240
        %p320 = pneg %p237
        %s321 = sand.u32 %s227, 1
        %s322 = scalar_lea.sflag [#allocation4], %s321
        %s323 = sand.u32 %s227, 1
        %s324 = scalar_lea.vmem [#allocation3], %s323
        %p325 = scmp.lt.s32.totalorder %s25, 1
        %s326 = scalar_select %p325, %s25, 1
        %s327 = smul.addr %s326, 2
        %s328 = scalar_lea.vmem %s0, %s327
        %v329 = vld [vmem:[%s328] sm:$0x3]
        %v330 = vld [vmem:[%s1] sm:$0xff]
        %v331 = vld [vmem:[%s1 + $0x8] sm:$0xff]
        %v332 = vld [vmem:[%s1 + $0x10] sm:$0xff]
        %v333 = vld [vmem:[%s1 + $0x18] sm:$0xff]
        %v334 = vld [vmem:[%s2] sm:$0xff]
        %v335 = vld [vmem:[%s2 + $0x8] sm:$0xff]
        %v336 = vld [vmem:[%s2 + $0x10] sm:$0xff]
        %v337 = vld [vmem:[%s2 + $0x18] sm:$0xff]
        %339 = vset.pattern.permute.xlu0 0
        %340 = vperm.xlu0 %339, %v334
        %v341 = vpop.permute.xlu0 %340
        %344 = vset.pattern.permute.xlu0 0
        %345 = vperm.xlu0 %344, %v335
        %v346 = vpop.permute.xlu0 %345
        %349 = vset.pattern.permute.xlu0 0
        %350 = vperm.xlu0 %349, %v336
        %v351 = vpop.permute.xlu0 %350
        %354 = vset.pattern.permute.xlu0 0
        %355 = vperm.xlu0 %354, %v337
        %v356 = vpop.permute.xlu0 %355
        %359 = vset.pattern.permute.xlu0 0
        %360 = vperm.xlu0 %359, %v330
        %v361 = vpop.permute.xlu0 %360
        %364 = vset.pattern.permute.xlu0 0
        %365 = vperm.xlu0 %364, %v331
        %v366 = vpop.permute.xlu0 %365
        %369 = vset.pattern.permute.xlu0 0
        %370 = vperm.xlu0 %369, %v332
        %v371 = vpop.permute.xlu0 %370
        %374 = vset.pattern.permute.xlu0 0
        %375 = vperm.xlu0 %374, %v333
        %v376 = vpop.permute.xlu0 %375
        %v378 = vlaneseq
        %v379 = vshrl.u32 %v378, 7
        %v380 = vsub.s32 0, %v379
        %v381 = vrot.slane %v329, %v380
        %v382 = vmul.f32 %v361, %v381
        %v383 = vmul.f32 %v366, %v381
        %v384 = vmul.f32 %v371, %v381
        %v385 = vmul.f32 %v376, %v381
        %v386 = vadd.f32 %v341, %v382
        %v387 = vadd.f32 %v346, %v383
        %v388 = vadd.f32 %v351, %v384
        %v389 = vadd.f32 %v356, %v385
        %390 = vset.pattern.permute.xlu0 1
        %391 = vperm.xlu0 %390, %v330
        %v392 = vpop.permute.xlu0 %391
        %394 = vset.pattern.permute.xlu0 1
        %395 = vperm.xlu0 %394, %v331
        %v396 = vpop.permute.xlu0 %395
        %398 = vset.pattern.permute.xlu0 1
        %399 = vperm.xlu0 %398, %v332
        %v400 = vpop.permute.xlu0 %399
        %402 = vset.pattern.permute.xlu0 1
        %403 = vperm.xlu0 %402, %v333
        %v404 = vpop.permute.xlu0 %403
        %v406 = vlaneseq
        %v407 = vshrl.u32 %v406, 7
        %v408 = vsub.s32 1, %v407
        %v409 = vrot.slane %v329, %v408
        %v410 = vmul.f32 %v392, %v409
        %v411 = vmul.f32 %v396, %v409
        %v412 = vmul.f32 %v400, %v409
        %v413 = vmul.f32 %v404, %v409
        %v414 = vadd.f32 %v386, %v410
        %v415 = vadd.f32 %v387, %v411
        %v416 = vadd.f32 %v388, %v412
        %v417 = vadd.f32 %v389, %v413
        %v418 = vtanh.pop %v414
        %v419 = vtanh.pop %v415
        %v420 = vtanh.pop %v416
        %v421 = vtanh.pop %v417
        %v422 = vld [vmem:[%s3] sm:$0xff]
        %v423 = vld [vmem:[%s3 + $0x8] sm:$0xff]
        %v424 = vld [vmem:[%s3 + $0x10] sm:$0xff]
        %v425 = vld [vmem:[%s3 + $0x18] sm:$0xff]
        %v426 = vld [vmem:[%s4] sm:$0xff]
        %v427 = vld [vmem:[%s4 + $0x8] sm:$0xff]
        %v428 = vld [vmem:[%s4 + $0x10] sm:$0xff]
        %v429 = vld [vmem:[%s4 + $0x18] sm:$0xff]
        %431 = vset.pattern.permute.xlu0 0
        %432 = vperm.xlu0 %431, %v426
        %v433 = vpop.permute.xlu0 %432
        %436 = vset.pattern.permute.xlu0 0
        %437 = vperm.xlu0 %436, %v427
        %v438 = vpop.permute.xlu0 %437
        %441 = vset.pattern.permute.xlu0 0
        %442 = vperm.xlu0 %441, %v428
        %v443 = vpop.permute.xlu0 %442
        %446 = vset.pattern.permute.xlu0 0
        %447 = vperm.xlu0 %446, %v429
        %v448 = vpop.permute.xlu0 %447
        %vm450 = vcmask 261120
        %v452 = vsel %vm450, %v422, 0
        %v455 = vsel %vm450, %v423, 0
        %v458 = vsel %vm450, %v424, 0
        %v461 = vsel %vm450, %v425, 0
        %463 = vmatprep.subr.mxu0 0.0
        %464 = vmatpush1.msra.mxu0 %v418
        %465 = vmatprep.subr.mxu0 0.0
        %466 = vmatpush1.msra.mxu0 %v419
        %467 = vmatprep.subr.mxu0 0.0
        %468 = vmatpush1.msra.mxu0 %v420
        %469 = vmatprep.subr.mxu0 0.0
        %470 = vmatpush1.msra.mxu0 %v421
        %471 = vmatprep.subr.mxu0 0.0
        %472 = vmatpush1.msra.mxu0 0.0
        %473 = vmatprep.subr.mxu0 0.0
        %474 = vmatpush1.msra.mxu0 0.0
        %475 = vmatprep.subr.mxu0 0.0
        %476 = vmatpush1.msra.mxu0 0.0
        %477 = vmatprep.subr.mxu0 0.0
        %478 = vmatpush1.msra.mxu0 0.0
        %479 = vmatprep.subr.mxu0 0.0
        %480 = vmatpush1.msra.mxu0 0.0
        %481 = vmatprep.subr.mxu0 0.0
        %482 = vmatpush1.msra.mxu0 0.0
        %483 = vmatprep.subr.mxu0 0.0
        %484 = vmatpush1.msra.mxu0 0.0
        %485 = vmatprep.subr.mxu0 0.0
        %486 = vmatpush1.msra.mxu0 0.0
        %487 = vmatprep.subr.mxu0 0.0
        %488 = vmatpush1.msra.mxu0 0.0
        %489 = vmatprep.subr.mxu0 0.0
        %490 = vmatpush1.msra.mxu0 0.0
        %491 = vmatprep.subr.mxu0 0.0
        %492 = vmatpush1.msra.mxu0 0.0
        %493 = vmatprep.subr.mxu0 0.0
        %494 = vmatpush1.msra.mxu0 0.0
        %495 = vmatprep.subr.mxu0 0.0
        %496 = vmatpush1.msra.mxu0 0.0
        %497 = vmatprep.subr.mxu0 0.0
        %498 = vmatpush1.msra.mxu0 0.0
        %499 = vmatprep.subr.mxu0 0.0
        %500 = vmatpush1.msra.mxu0 0.0
        %501 = vmatprep.subr.mxu0 0.0
        %502 = vmatpush1.msra.mxu0 0.0
        %503 = vmatprep.subr.mxu0 0.0
        %504 = vmatpush1.msra.mxu0 0.0
        %505 = vmatprep.subr.mxu0 0.0
        %506 = vmatpush1.msra.mxu0 0.0
        %507 = vmatprep.subr.mxu0 0.0
        %508 = vmatpush1.msra.mxu0 0.0
        %509 = vmatprep.subr.mxu0 0.0
        %510 = vmatpush1.msra.mxu0 0.0
        %511 = vmatprep.subr.mxu0 0.0
        %512 = vmatpush1.msra.mxu0 0.0
        %513 = vmatprep.subr.mxu0 0.0
        %514 = vmatpush1.msra.mxu0 0.0
        %515 = vmatprep.subr.mxu0 0.0
        %516 = vmatpush1.msra.mxu0 0.0
        %517 = vmatprep.subr.mxu0 0.0
        %518 = vmatpush1.msra.mxu0 0.0
        %519 = vmatprep.subr.mxu0 0.0
        %520 = vmatpush1.msra.mxu0 0.0
        %521 = vmatprep.subr.mxu0 0.0
        %522 = vmatpush1.msra.mxu0 0.0
        %523 = vmatprep.subr.mxu0 0.0
        %524 = vmatpush1.msra.mxu0 0.0
        %525 = vmatprep.subr.mxu0 0.0
        %526 = vmatpush1.msra.mxu0 0.0
        %527 = vmatprep.mubr.f32.mxu0 0.0
        %528 = vmatmul.mubr.f32.gmra.mrb[0].mxu0 %v452
        %v529 = vpop.f32.mrb[0].mxu0
        %v530 = vadd.f32 %v433, %v529
        %v531 = vpop.f32.mrb[0].mxu0
        %532 = vmatprep.mubr.f32.mxu0 0.0
        %533 = vmatmul.mubr.f32.gmra.mrb[0].mxu0 %v455
        %v534 = vpop.f32.mrb[0].mxu0
        %v535 = vadd.f32 %v438, %v534
        %v536 = vpop.f32.mrb[0].mxu0
        %537 = vmatprep.mubr.f32.mxu0 0.0
        %538 = vmatmul.mubr.f32.gmra.mrb[0].mxu0 %v458
        %v539 = vpop.f32.mrb[0].mxu0
        %v540 = vadd.f32 %v443, %v539
        %v541 = vpop.f32.mrb[0].mxu0
        %542 = vmatprep.mubr.f32.mxu0 0.0
        %543 = vmatmul.mubr.f32.gmra.mrb[0].mxu0 %v461
        %v544 = vpop.f32.mrb[0].mxu0
        %v545 = vadd.f32 %v448, %v544
        %v546 = vpop.f32.mrb[0].mxu0
        %547 = vdwg.mxu0
        %v548 = vtanh.pop %v530
        %v549 = vtanh.pop %v535
        %v550 = vtanh.pop %v540
        %v551 = vtanh.pop %v545
        %v552 = vld [vmem:[%s5] sm:$0xff]
        %v553 = vld [vmem:[%s5 + $0x8] sm:$0xff]
        %v554 = vld [vmem:[%s5 + $0x10] sm:$0xff]
        %v555 = vld [vmem:[%s5 + $0x18] sm:$0xff]
        %v556 = vld [vmem:[%s6] sm:$0xff]
        %v557 = vld [vmem:[%s6 + $0x8] sm:$0xff]
        %v558 = vld [vmem:[%s6 + $0x10] sm:$0xff]
        %v559 = vld [vmem:[%s6 + $0x18] sm:$0xff]
        %561 = vset.pattern.permute.xlu0 0
        %562 = vperm.xlu0 %561, %v556
        %v563 = vpop.permute.xlu0 %562
        %566 = vset.pattern.permute.xlu0 0
        %567 = vperm.xlu0 %566, %v557
        %v568 = vpop.permute.xlu0 %567
        %571 = vset.pattern.permute.xlu0 0
        %572 = vperm.xlu0 %571, %v558
        %v573 = vpop.permute.xlu0 %572
        %576 = vset.pattern.permute.xlu0 0
        %577 = vperm.xlu0 %576, %v559
        %v578 = vpop.permute.xlu0 %577
        %v581 = vsel %vm450, %v552, 0
        %v584 = vsel %vm450, %v553, 0
        %v587 = vsel %vm450, %v554, 0
        %v590 = vsel %vm450, %v555, 0
        %592 = vmatprep.subr.mxu0 0.0
        %593 = vmatpush1.msra.mxu0 %v548
        %594 = vmatprep.subr.mxu0 0.0
        %595 = vmatpush1.msra.mxu0 %v549
        %596 = vmatprep.subr.mxu0 0.0
        %597 = vmatpush1.msra.mxu0 %v550
        %598 = vmatprep.subr.mxu0 0.0
        %599 = vmatpush1.msra.mxu0 %v551
        %600 = vmatprep.subr.mxu0 0.0
        %601 = vmatpush1.msra.mxu0 0.0
        %602 = vmatprep.subr.mxu0 0.0
        %603 = vmatpush1.msra.mxu0 0.0
        %604 = vmatprep.subr.mxu0 0.0
        %605 = vmatpush1.msra.mxu0 0.0
        %606 = vmatprep.subr.mxu0 0.0
        %607 = vmatpush1.msra.mxu0 0.0
        %608 = vmatprep.subr.mxu0 0.0
        %609 = vmatpush1.msra.mxu0 0.0
        %610 = vmatprep.subr.mxu0 0.0
        %611 = vmatpush1.msra.mxu0 0.0
        %612 = vmatprep.subr.mxu0 0.0
        %613 = vmatpush1.msra.mxu0 0.0
        %614 = vmatprep.subr.mxu0 0.0
        %615 = vmatpush1.msra.mxu0 0.0
        %616 = vmatprep.subr.mxu0 0.0
        %617 = vmatpush1.msra.mxu0 0.0
        %618 = vmatprep.subr.mxu0 0.0
        %619 = vmatpush1.msra.mxu0 0.0
        %620 = vmatprep.subr.mxu0 0.0
        %621 = vmatpush1.msra.mxu0 0.0
        %622 = vmatprep.subr.mxu0 0.0
        %623 = vmatpush1.msra.mxu0 0.0
        %624 = vmatprep.subr.mxu0 0.0
        %625 = vmatpush1.msra.mxu0 0.0
        %626 = vmatprep.subr.mxu0 0.0
        %627 = vmatpush1.msra.mxu0 0.0
        %628 = vmatprep.subr.mxu0 0.0
        %629 = vmatpush1.msra.mxu0 0.0
        %630 = vmatprep.subr.mxu0 0.0
        %631 = vmatpush1.msra.mxu0 0.0
        %632 = vmatprep.subr.mxu0 0.0
        %633 = vmatpush1.msra.mxu0 0.0
        %634 = vmatprep.subr.mxu0 0.0
        %635 = vmatpush1.msra.mxu0 0.0
        %636 = vmatprep.subr.mxu0 0.0
        %637 = vmatpush1.msra.mxu0 0.0
        %638 = vmatprep.subr.mxu0 0.0
        %639 = vmatpush1.msra.mxu0 0.0
        %640 = vmatprep.subr.mxu0 0.0
        %641 = vmatpush1.msra.mxu0 0.0
        %642 = vmatprep.subr.mxu0 0.0
        %643 = vmatpush1.msra.mxu0 0.0
        %644 = vmatprep.subr.mxu0 0.0
        %645 = vmatpush1.msra.mxu0 0.0
        %646 = vmatprep.subr.mxu0 0.0
        %647 = vmatpush1.msra.mxu0 0.0
        %648 = vmatprep.subr.mxu0 0.0
        %649 = vmatpush1.msra.mxu0 0.0
        %650 = vmatprep.subr.mxu0 0.0
        %651 = vmatpush1.msra.mxu0 0.0
        %652 = vmatprep.subr.mxu0 0.0
        %653 = vmatpush1.msra.mxu0 0.0
        %654 = vmatprep.subr.mxu0 0.0
        %655 = vmatpush1.msra.mxu0 0.0
        %656 = vmatprep.mubr.f32.mxu0 0.0
        %657 = vmatmul.mubr.f32.gmra.mrb[0].mxu0 %v581
        %v658 = vpop.f32.mrb[0].mxu0
        %v659 = vadd.f32 %v563, %v658
        %v660 = vpop.f32.mrb[0].mxu0
        %661 = vmatprep.mubr.f32.mxu0 0.0
        %662 = vmatmul.mubr.f32.gmra.mrb[0].mxu0 %v584
        %v663 = vpop.f32.mrb[0].mxu0
        %v664 = vadd.f32 %v568, %v663
        %v665 = vpop.f32.mrb[0].mxu0
        %666 = vmatprep.mubr.f32.mxu0 0.0
        %667 = vmatmul.mubr.f32.gmra.mrb[0].mxu0 %v587
        %v668 = vpop.f32.mrb[0].mxu0
        %v669 = vadd.f32 %v573, %v668
        %v670 = vpop.f32.mrb[0].mxu0
        %671 = vmatprep.mubr.f32.mxu0 0.0
        %672 = vmatmul.mubr.f32.gmra.mrb[0].mxu0 %v590
        %v673 = vpop.f32.mrb[0].mxu0
        %v674 = vadd.f32 %v578, %v673
        %v675 = vpop.f32.mrb[0].mxu0
        %676 = vdwg.mxu0
        %v677 = vtanh.pop %v659
        %v678 = vtanh.pop %v664
        %v679 = vtanh.pop %v669
        %v680 = vtanh.pop %v674
        %v681 = vld [vmem:[%s7] sm:$0x1]
        %v682 = vld [vmem:[#allocation2] sm:$0x1]
        %684 = vset.pattern.permute.xlu0 0
        %685 = vperm.xlu0 %684, %v682
        %v686 = vpop.permute.xlu0 %685
        %v688 = vlaneseq
        %v689 = vshrl.u32 %v688, 7
        %v690 = vsub.s32 0, %v689
        %v691 = vrot.slane %v686, %v690
        %v693 = vsel %vm450, %v681, 0
        %695 = vmatprep.subr.mxu0 0.0
        %696 = vmatpush1.msra.mxu0 %v677
        %697 = vmatprep.subr.mxu0 0.0
        %698 = vmatpush1.msra.mxu0 %v678
        %699 = vmatprep.subr.mxu0 0.0
        %700 = vmatpush1.msra.mxu0 %v679
        %701 = vmatprep.subr.mxu0 0.0
        %702 = vmatpush1.msra.mxu0 %v680
        %703 = vmatprep.subr.mxu0 0.0
        %704 = vmatpush1.msra.mxu0 0.0
        %705 = vmatprep.subr.mxu0 0.0
        %706 = vmatpush1.msra.mxu0 0.0
        %707 = vmatprep.subr.mxu0 0.0
        %708 = vmatpush1.msra.mxu0 0.0
        %709 = vmatprep.subr.mxu0 0.0
        %710 = vmatpush1.msra.mxu0 0.0
        %711 = vmatprep.subr.mxu0 0.0
        %712 = vmatpush1.msra.mxu0 0.0
        %713 = vmatprep.subr.mxu0 0.0
        %714 = vmatpush1.msra.mxu0 0.0
        %715 = vmatprep.subr.mxu0 0.0
        %716 = vmatpush1.msra.mxu0 0.0
        %717 = vmatprep.subr.mxu0 0.0
        %718 = vmatpush1.msra.mxu0 0.0
        %719 = vmatprep.subr.mxu0 0.0
        %720 = vmatpush1.msra.mxu0 0.0
        %721 = vmatprep.subr.mxu0 0.0
        %722 = vmatpush1.msra.mxu0 0.0
        %723 = vmatprep.subr.mxu0 0.0
        %724 = vmatpush1.msra.mxu0 0.0
        %725 = vmatprep.subr.mxu0 0.0
        %726 = vmatpush1.msra.mxu0 0.0
        %727 = vmatprep.subr.mxu0 0.0
        %728 = vmatpush1.msra.mxu0 0.0
        %729 = vmatprep.subr.mxu0 0.0
        %730 = vmatpush1.msra.mxu0 0.0
        %731 = vmatprep.subr.mxu0 0.0
        %732 = vmatpush1.msra.mxu0 0.0
        %733 = vmatprep.subr.mxu0 0.0
        %734 = vmatpush1.msra.mxu0 0.0
        %735 = vmatprep.subr.mxu0 0.0
        %736 = vmatpush1.msra.mxu0 0.0
        %737 = vmatprep.subr.mxu0 0.0
        %738 = vmatpush1.msra.mxu0 0.0
        %739 = vmatprep.subr.mxu0 0.0
        %740 = vmatpush1.msra.mxu0 0.0
        %741 = vmatprep.subr.mxu0 0.0
        %742 = vmatpush1.msra.mxu0 0.0
        %743 = vmatprep.subr.mxu0 0.0
        %744 = vmatpush1.msra.mxu0 0.0
        %745 = vmatprep.subr.mxu0 0.0
        %746 = vmatpush1.msra.mxu0 0.0
        %747 = vmatprep.subr.mxu0 0.0
        %748 = vmatpush1.msra.mxu0 0.0
        %749 = vmatprep.subr.mxu0 0.0
        %750 = vmatpush1.msra.mxu0 0.0
        %751 = vmatprep.subr.mxu0 0.0
        %752 = vmatpush1.msra.mxu0 0.0
        %753 = vmatprep.subr.mxu0 0.0
        %754 = vmatpush1.msra.mxu0 0.0
        %755 = vmatprep.subr.mxu0 0.0
        %756 = vmatpush1.msra.mxu0 0.0
        %757 = vmatprep.subr.mxu0 0.0
        %758 = vmatpush1.msra.mxu0 0.0
        %759 = vmatprep.mubr.f32.mxu0 0.0
        %760 = vmatmul.mubr.f32.gmra.mrb[0].mxu0 %v693
        %v761 = vpop.f32.mrb[0].mxu0
        %v762 = vadd.f32 %v691, %v761
        %v763 = vpop.f32.mrb[0].mxu0
        %764 = vdwg.mxu0
        %765 = vst [vmem:[%s324] sm:$0x1] %v762
        %s766 = sand.u32 %s227, 1
        %s767 = scalar_lea.sflag [#allocation4], %s766
        %s768 = sand.u32 %s227, 1
        %s769 = scalar_lea.vmem [#allocation3], %s768
        // Predicated region
        $region57: #{tpu_custom_call.1} parent=55 // pred_check
          %p770 = pneg %p237
        $region58: #{tpu_custom_call.1} parent=55 // pred_check_branch
          %772 = sbr.rel (%p770) target = $region60
        $region59: #{tpu_custom_call.1} parent=55 // pred_region
          %s774 = ssub.s32 16, 16
          %775 = vsyncadd %s767, %s774
          %s776 = smul.addr %s25, 16
          %s777 = scalar_lea.hbm %s9, %s776
          %s779 = sshll.u32 %s769, 4
          %s780 = int_to_ptr.vmem [resolvable:$true] %s779
          %782 = dma.vmem_to_hbm [thread:$0]  %s780, 16, %s777, %s767
        $region60: #{tpu_custom_call.1} parent=55 // pred_fallthru
          _
      $region56: #{tpu_custom_call.1} parent=5 // pred_fallthru
        _
      %p783 = scmp.le.s32.totalorder 2, %s20
      // Predicated region
      $region61: #{tpu_custom_call.1} parent=5 // pred_check
        %p784 = pneg %p783
      $region62: #{tpu_custom_call.1} parent=5 // pred_check_branch
        %786 = sbr.rel (%p784) target = $region64
      $region63: #{tpu_custom_call.1} parent=5 // pred_region
        %s787 = ssub.s32 %s20, 2
        // Predicated region
        $region65: #{tpu_custom_call.1} parent=63 // pred_check
          %p788 = pneg %p243
        $region66: #{tpu_custom_call.1} parent=63 // pred_check_branch
          %790 = sbr.rel (%p788) target = $region68
        $region67: #{tpu_custom_call.1} parent=63 // pred_region
          %s791 = sand.u32 %s228, 1
          %s792 = scalar_lea.sflag [#allocation4], %s791
          %s793 = sand.u32 %s228, 1
          %s794 = scalar_lea.vmem [#allocation3], %s793
          %795 = dma.done %s792, 16
        $region68: #{tpu_custom_call.1} parent=63 // pred_fallthru
          _
      $region64: #{tpu_custom_call.1} parent=5 // pred_fallthru
        _
    $region6: #{tpu_custom_call.1} parent=1 // loop_footer
      %s24 = sadd.s32 1, %s20
    $region7: #{tpu_custom_call.1} parent=1 // loop_footer_branch
      %19 = sbr.rel target = $region3
    $region8: #{tpu_custom_call.1} parent=1 // loop_exit
      _
    %796 = vsyncpa [#allocation4], 1
    %s797 = scalar_lea.sflag [#allocation4], 1
    %798 = vsyncpa %s797, 1

</llo_original>
